<compile_context>
chip_gen: v7x
topology: tpu7x:2x2x1
jax: 0.10.0
libtpu: 0.0.40
codegen_flags: <defaults>
</compile_context>

<pallas_src>
import jax
import jax.numpy as jnp
from jax.experimental import pallas as pl
from jax.experimental.pallas import tpu as pltpu


def highway_kernel(x_ref, w_ref, b_ref, o_ref):
    # x_ref: (TM, S*pack)                 f32 packed activations
    # w_ref: (depth, S*pack, 2*S*pack)    bf16 fused block-diag [lin | gate]
    # b_ref: (depth, 1, 2*S*pack)         f32 fused tiled      [lin | gate]
    # o_ref: (TM, S*pack)
    x = x_ref[...].astype(jnp.float32)
    depth, s_packed, _ = w_ref.shape
    # depth is small & static -> unrolled Python loop (traced once).
    for d in range(depth):
        # One fused MXU matmul per layer (bf16 operands, f32 accumulation).
        z = jnp.dot(x.astype(w_ref.dtype), w_ref[d],
                    preferred_element_type=jnp.float32) + b_ref[d]
        h = jnp.maximum(z[:, :s_packed], 0.0)            # ReLU (VPU, f32)
        # sigmoid(t) == 0.5*tanh(0.5*t) + 0.5 : single EUP transcendental.
        g = 0.5 * jnp.tanh(0.5 * z[:, s_packed:]) + 0.5
        x = x + g * (h - x)                              # highway mix
    o_ref[...] = x.astype(o_ref.dtype)


def prepare_highway_params(w, b, wg, bg, *, pack=4, matmul_dtype=jnp.bfloat16):
    """Build fused block-diagonal weights/biases ONCE at model init.

    w, wg: (depth, S, S) stored as (in, out) (i.e. transposed vs nn.Linear).
    b, bg: (depth, 1, S).
    Returns fused_w (depth, S*pack, 2*S*pack) and fused_b (depth, 1, 2*S*pack).
    """
    depth, S, _ = w.shape
    eye = jnp.eye(pack, dtype=jnp.float32)

    def block_diag(m):
        # out[d, i*S+a, j*S+b] = eye[i, j] * m[d, a, b]
        return jnp.einsum("ij,dab->diajb", eye, m.astype(jnp.float32)).reshape(
            depth, S * pack, S * pack)

    def tile_bias(v):
        return jnp.tile(v.astype(jnp.float32), (1, 1, pack))

    fused_w = jnp.concatenate([block_diag(w), block_diag(wg)], axis=-1)
    fused_b = jnp.concatenate([tile_bias(b), tile_bias(bg)], axis=-1)
    return fused_w.astype(matmul_dtype), fused_b


def highway_net(x, fused_w, fused_b, *, pack=4, tm=None):
    """x: (..., S); fused_w/fused_b from prepare_highway_params (same pack)."""
    orig_shape = x.shape
    depth, s_packed, _ = fused_w.shape
    S = s_packed // pack
    assert orig_shape[-1] == S

    x2 = x.reshape(-1, S).astype(jnp.float32)
    N = x2.shape[0]
    n_pad = (-N) % pack                      # rows so the packing reshape is exact
    if n_pad:
        x2 = jnp.pad(x2, ((0, n_pad), (0, 0)))
    rows = (N + n_pad) // pack
    x_p = x2.reshape(rows, s_packed)         # free, contiguous reshape

    # Tile selection: >=2 "parallel" grid steps when possible so both v7x
    # TensorCores get work; single-TC chips only pay ~0.35us extra per step.
    if tm is None:
        tm = (((rows + 1) // 2 + 7) // 8) * 8 if rows >= 16 else rows
    tm = min(tm, rows)
    if tm < rows and tm % 8 != 0:
        tm = max(8, (tm // 8) * 8)
    if tm < 8:
        tm = rows
    grid = (pl.cdiv(rows, tm),)

    w_itemsize = jnp.dtype(fused_w.dtype).itemsize
    cost = pl.CostEstimate(
        flops=2 * rows * s_packed * (2 * s_packed) * depth,
        transcendentals=rows * s_packed * depth,          # one tanh per gate elem
        bytes_accessed=2 * rows * s_packed * 4
        + fused_w.size * w_itemsize + fused_b.size * 4,
    )

    out_p = pl.pallas_call(
        highway_kernel,
        out_shape=jax.ShapeDtypeStruct((rows, s_packed), jnp.float32),
        grid_spec=pltpu.PrefetchScalarGridSpec(
            num_scalar_prefetch=0,
            grid=grid,
            in_specs=[
                pl.BlockSpec((tm, s_packed), lambda i: (i, 0)),
                # Constant index_map -> weights/biases stay resident in VMEM.
                pl.BlockSpec((depth, s_packed, 2 * s_packed), lambda i: (0, 0, 0)),
                pl.BlockSpec((depth, 1, 2 * s_packed), lambda i: (0, 0, 0)),
            ],
            out_specs=pl.BlockSpec((tm, s_packed), lambda i: (i, 0)),
        ),
        compiler_params=pltpu.CompilerParams(
            dimension_semantics=("parallel",)),
        cost_estimate=cost,
    )(x_p, fused_w, fused_b)

    out = out_p.reshape(rows * pack, S)
    if n_pad:
        out = out[:N]
    return out.reshape(orig_shape).astype(x.dtype)


def highway_ref(x, w, b, wg, bg, matmul_dtype=jnp.float32):
    # Pure-JAX reference mirroring the PyTorch forward (optionally with
    # bf16 matmul operands to match the kernel's precision).
    x = x.astype(jnp.float32)
    for d in range(w.shape[0]):
        h = jnp.maximum(
            jnp.dot(x.astype(matmul_dtype), w[d].astype(matmul_dtype),
                    preferred_element_type=jnp.float32) + b[d], 0.0)
        g = jax.nn.sigmoid(
            jnp.dot(x.astype(matmul_dtype), wg[d].astype(matmul_dtype),
                    preferred_element_type=jnp.float32) + bg[d])
        x = h * g + (1.0 - g) * x
    return x


if __name__ == "__main__":
    size = 32      # HighwayNet(size=32, depth=3)
    depth = 3
    batch, seq = 2, 128          # N = 256 flattened rows -> 64 packed rows

    key = jax.random.PRNGKey(0)
    kx, kw, kb, kwg = jax.random.split(key, 4)

    scale = 1.0 / jnp.sqrt(jnp.float32(size))     # ~ nn.Linear default range
    x = jax.random.normal(kx, (batch, seq, size), dtype=jnp.float32)
    # Weights stored as (depth, S_in, S_out), i.e. already transposed vs nn.Linear.
    w = jax.random.uniform(kw, (depth, size, size), jnp.float32, -scale, scale)
    b = jax.random.uniform(kb, (depth, 1, size), jnp.float32, -scale, scale)
    wg = jax.random.uniform(kwg, (depth, size, size), jnp.float32, -scale, scale)
    bg = jnp.zeros((depth, 1, size), jnp.float32)  # gate_lin.bias.data.fill_(0.0)

    # Weight prep happens ONCE, outside the per-call path.
    # pack=4 -> 128 lanes (portable); on v6e/v7x pack=8 fills the 256-deep MXU.
    fused_w, fused_b = prepare_highway_params(w, b, wg, bg, pack=4)
    fused_w = jax.block_until_ready(fused_w)

    out = highway_net(x, fused_w, fused_b, pack=4)
    out = jax.block_until_ready(out)

    ref_bf16 = highway_ref(x, w, b, wg, bg, matmul_dtype=jnp.bfloat16)
    ref_f32 = highway_ref(x, w, b, wg, bg)

    assert out.shape == (batch, seq, size)
    # Tight check vs a precision-matched (bf16-operand) reference.
    assert jnp.allclose(out, ref_bf16, atol=1e-3, rtol=1e-3)
    # Loose check vs the exact f32 PyTorch-equivalent forward.
    assert jnp.allclose(out, ref_f32, atol=5e-2, rtol=5e-2)
    print("KERNEL_OK")
</pallas_src>

<mosaic_0001>
module attributes {stable_mosaic.version = 11 : i64} {
  func.func @highway_kernel(%arg0: i32, %arg1: memref<32x128xf32, #tpu.memory_space<vmem>>, %arg2: memref<3x128x256xbf16, #tpu.memory_space<vmem>>, %arg3: memref<3x1x256xf32, #tpu.memory_space<vmem>>, %arg4: memref<32x128xf32, #tpu.memory_space<vmem>>) attributes {dimension_semantics = [#tpu.dimension_semantics<parallel>], iteration_bounds = array<i64: 2>, scalar_prefetch = 0 : i64, scratch_operands = 0 : i64, tpu.core_type = #tpu.core_type<tc>, window_params = [{transform_indices = @transform_0, window_bounds = array<i64: 32, 128>}, {pipeline_mode = #tpu.pipeline_mode<synchronous>, transform_indices = @transform_1, window_bounds = array<i64: 3, 128, 256>}, {pipeline_mode = #tpu.pipeline_mode<synchronous>, transform_indices = @transform_2, window_bounds = array<i64: 3, 1, 256>}, {transform_indices = @transform_3, window_bounds = array<i64: 32, 128>}]} {
    %c0 = arith.constant 0 : index
    %c0_0 = arith.constant 0 : index
    %0 = vector.load %arg1[%c0, %c0_0] : memref<32x128xf32, #tpu.memory_space<vmem>>, vector<32x128xf32>
    %1 = arith.truncf %0 : vector<32x128xf32> to vector<32x128xbf16>
    %c0_1 = arith.constant 0 : index
    %c0_2 = arith.constant 0 : index
    %c0_3 = arith.constant 0 : index
    %2 = vector.load %arg2[%c0_1, %c0_2, %c0_3] : memref<3x128x256xbf16, #tpu.memory_space<vmem>>, vector<1x128x256xbf16>
    %3 = vector.shape_cast %2 : vector<1x128x256xbf16> to vector<128x256xbf16>
    %cst = arith.constant dense<0.000000e+00> : vector<32x256xf32>
    %4 = tpu.matmul %1, %3, %cst {dimension_numbers = #tpu.dot_dimension_numbers<[1], [0], [0], [1], [0, 0, 1, 1], [], []>} : vector<32x128xbf16>, vector<128x256xbf16>, vector<32x256xf32> -> vector<32x256xf32>
    %c0_4 = arith.constant 0 : index
    %c0_5 = arith.constant 0 : index
    %c0_6 = arith.constant 0 : index
    %5 = vector.load %arg3[%c0_4, %c0_5, %c0_6] : memref<3x1x256xf32, #tpu.memory_space<vmem>>, vector<1x1x256xf32>
    %6 = vector.shape_cast %5 : vector<1x1x256xf32> to vector<1x256xf32>
    %7 = vector.broadcast %6 : vector<1x256xf32> to vector<32x256xf32>
    %8 = arith.addf %4, %7 : vector<32x256xf32>
    %9 = vector.extract_strided_slice %8 {offsets = [0, 0], sizes = [32, 128], strides = [1, 1]} : vector<32x256xf32> to vector<32x128xf32>
    %cst_7 = arith.constant 0.000000e+00 : f32
    %10 = vector.broadcast %cst_7 : f32 to vector<32x128xf32>
    %11 = arith.maximumf %9, %10 : vector<32x128xf32>
    %12 = vector.extract_strided_slice %8 {offsets = [0, 128], sizes = [32, 128], strides = [1, 1]} : vector<32x256xf32> to vector<32x128xf32>
    %cst_8 = arith.constant 5.000000e-01 : f32
    %13 = vector.broadcast %cst_8 : f32 to vector<32x128xf32>
    %14 = arith.mulf %13, %12 : vector<32x128xf32>
    %15 = math.tanh %14 : vector<32x128xf32>
    %cst_9 = arith.constant 5.000000e-01 : f32
    %16 = vector.broadcast %cst_9 : f32 to vector<32x128xf32>
    %17 = arith.mulf %16, %15 : vector<32x128xf32>
    %cst_10 = arith.constant 5.000000e-01 : f32
    %18 = vector.broadcast %cst_10 : f32 to vector<32x128xf32>
    %19 = arith.addf %17, %18 : vector<32x128xf32>
    %20 = arith.subf %11, %0 : vector<32x128xf32>
    %21 = arith.mulf %19, %20 : vector<32x128xf32>
    %22 = arith.addf %0, %21 : vector<32x128xf32>
    %23 = arith.truncf %22 : vector<32x128xf32> to vector<32x128xbf16>
    %c1 = arith.constant 1 : index
    %c0_11 = arith.constant 0 : index
    %c0_12 = arith.constant 0 : index
    %24 = vector.load %arg2[%c1, %c0_11, %c0_12] : memref<3x128x256xbf16, #tpu.memory_space<vmem>>, vector<1x128x256xbf16>
    %25 = vector.shape_cast %24 : vector<1x128x256xbf16> to vector<128x256xbf16>
    %cst_13 = arith.constant dense<0.000000e+00> : vector<32x256xf32>
    %26 = tpu.matmul %23, %25, %cst_13 {dimension_numbers = #tpu.dot_dimension_numbers<[1], [0], [0], [1], [0, 0, 1, 1], [], []>} : vector<32x128xbf16>, vector<128x256xbf16>, vector<32x256xf32> -> vector<32x256xf32>
    %c1_14 = arith.constant 1 : index
    %c0_15 = arith.constant 0 : index
    %c0_16 = arith.constant 0 : index
    %27 = vector.load %arg3[%c1_14, %c0_15, %c0_16] : memref<3x1x256xf32, #tpu.memory_space<vmem>>, vector<1x1x256xf32>
    %28 = vector.shape_cast %27 : vector<1x1x256xf32> to vector<1x256xf32>
    %29 = vector.broadcast %28 : vector<1x256xf32> to vector<32x256xf32>
    %30 = arith.addf %26, %29 : vector<32x256xf32>
    %31 = vector.extract_strided_slice %30 {offsets = [0, 0], sizes = [32, 128], strides = [1, 1]} : vector<32x256xf32> to vector<32x128xf32>
    %cst_17 = arith.constant 0.000000e+00 : f32
    %32 = vector.broadcast %cst_17 : f32 to vector<32x128xf32>
    %33 = arith.maximumf %31, %32 : vector<32x128xf32>
    %34 = vector.extract_strided_slice %30 {offsets = [0, 128], sizes = [32, 128], strides = [1, 1]} : vector<32x256xf32> to vector<32x128xf32>
    %cst_18 = arith.constant 5.000000e-01 : f32
    %35 = vector.broadcast %cst_18 : f32 to vector<32x128xf32>
    %36 = arith.mulf %35, %34 : vector<32x128xf32>
    %37 = math.tanh %36 : vector<32x128xf32>
    %cst_19 = arith.constant 5.000000e-01 : f32
    %38 = vector.broadcast %cst_19 : f32 to vector<32x128xf32>
    %39 = arith.mulf %38, %37 : vector<32x128xf32>
    %cst_20 = arith.constant 5.000000e-01 : f32
    %40 = vector.broadcast %cst_20 : f32 to vector<32x128xf32>
    %41 = arith.addf %39, %40 : vector<32x128xf32>
    %42 = arith.subf %33, %22 : vector<32x128xf32>
    %43 = arith.mulf %41, %42 : vector<32x128xf32>
    %44 = arith.addf %22, %43 : vector<32x128xf32>
    %45 = arith.truncf %44 : vector<32x128xf32> to vector<32x128xbf16>
    %c2 = arith.constant 2 : index
    %c0_21 = arith.constant 0 : index
    %c0_22 = arith.constant 0 : index
    %46 = vector.load %arg2[%c2, %c0_21, %c0_22] : memref<3x128x256xbf16, #tpu.memory_space<vmem>>, vector<1x128x256xbf16>
    %47 = vector.shape_cast %46 : vector<1x128x256xbf16> to vector<128x256xbf16>
    %cst_23 = arith.constant dense<0.000000e+00> : vector<32x256xf32>
    %48 = tpu.matmul %45, %47, %cst_23 {dimension_numbers = #tpu.dot_dimension_numbers<[1], [0], [0], [1], [0, 0, 1, 1], [], []>} : vector<32x128xbf16>, vector<128x256xbf16>, vector<32x256xf32> -> vector<32x256xf32>
    %c2_24 = arith.constant 2 : index
    %c0_25 = arith.constant 0 : index
    %c0_26 = arith.constant 0 : index
    %49 = vector.load %arg3[%c2_24, %c0_25, %c0_26] : memref<3x1x256xf32, #tpu.memory_space<vmem>>, vector<1x1x256xf32>
    %50 = vector.shape_cast %49 : vector<1x1x256xf32> to vector<1x256xf32>
    %51 = vector.broadcast %50 : vector<1x256xf32> to vector<32x256xf32>
    %52 = arith.addf %48, %51 : vector<32x256xf32>
    %53 = vector.extract_strided_slice %52 {offsets = [0, 0], sizes = [32, 128], strides = [1, 1]} : vector<32x256xf32> to vector<32x128xf32>
    %cst_27 = arith.constant 0.000000e+00 : f32
    %54 = vector.broadcast %cst_27 : f32 to vector<32x128xf32>
    %55 = arith.maximumf %53, %54 : vector<32x128xf32>
    %56 = vector.extract_strided_slice %52 {offsets = [0, 128], sizes = [32, 128], strides = [1, 1]} : vector<32x256xf32> to vector<32x128xf32>
    %cst_28 = arith.constant 5.000000e-01 : f32
    %57 = vector.broadcast %cst_28 : f32 to vector<32x128xf32>
    %58 = arith.mulf %57, %56 : vector<32x128xf32>
    %59 = math.tanh %58 : vector<32x128xf32>
    %cst_29 = arith.constant 5.000000e-01 : f32
    %60 = vector.broadcast %cst_29 : f32 to vector<32x128xf32>
    %61 = arith.mulf %60, %59 : vector<32x128xf32>
    %cst_30 = arith.constant 5.000000e-01 : f32
    %62 = vector.broadcast %cst_30 : f32 to vector<32x128xf32>
    %63 = arith.addf %61, %62 : vector<32x128xf32>
    %64 = arith.subf %55, %44 : vector<32x128xf32>
    %65 = arith.mulf %63, %64 : vector<32x128xf32>
    %66 = arith.addf %44, %65 : vector<32x128xf32>
    %c0_31 = arith.constant 0 : index
    %c0_32 = arith.constant 0 : index
    %67 = vector.load %arg4[%c0_31, %c0_32] : memref<32x128xf32, #tpu.memory_space<vmem>>, vector<32x128xf32>
    tpu.vector_store %arg4[%c0_31, %c0_32], %66 {strides = array<i32>} : memref<32x128xf32, #tpu.memory_space<vmem>>, vector<32x128xf32>,
    return
  }
  func.func @transform_0(%arg0: i32) -> (i32, i32) {
    %c0_i32 = arith.constant 0 : i32
    %c0_i32_0 = arith.constant 0 : i32
    return %arg0, %c0_i32 : i32, i32
  }
  func.func @transform_1(%arg0: i32) -> (i32, i32, i32) {
    %c0_i32 = arith.constant 0 : i32
    %c0_i32_0 = arith.constant 0 : i32
    %c0_i32_1 = arith.constant 0 : i32
    %c0_i32_2 = arith.constant 0 : i32
    return %c0_i32, %c0_i32_0, %c0_i32_1 : i32, i32, i32
  }
  func.func @transform_2(%arg0: i32) -> (i32, i32, i32) {
    %c0_i32 = arith.constant 0 : i32
    %c0_i32_0 = arith.constant 0 : i32
    %c0_i32_1 = arith.constant 0 : i32
    %c0_i32_2 = arith.constant 0 : i32
    return %c0_i32, %c0_i32_0, %c0_i32_1 : i32, i32, i32
  }
  func.func @transform_3(%arg0: i32) -> (i32, i32) {
    %c0_i32 = arith.constant 0 : i32
    %c0_i32_0 = arith.constant 0 : i32
    return %arg0, %c0_i32 : i32, i32
  }
}

</mosaic_0001>

<llo_original>
// kernel: tpu_custom_call.1
$region0: #{tpu_custom_call.1}
  #allocation0 [shape = 'u32[]', space=smem, size = 0x4, offset = 0x4, fixed_abs, tag = 'smem constant byte address 0x4 - core index']
  #allocation1 [shape = 'u32[144,128]{1,0:T(1,128)}', space=vmem, size = 0x12000, scoped, tag = 'internal scratch']
  %s0 = inlined_call_operand.hbm [shape: f32[64,128], index: 0, kind: input, shape index: {}]
  %s1 = inlined_call_operand.hbm [shape: bf16[3,128,256], index: 1, kind: input, shape index: {}]
  %s2 = inlined_call_operand.vmem [shape: f32[3,1,256], index: 2, kind: input, shape index: {}]
  %s3 = inlined_call_operand.hbm [shape: f32[64,128], index: 3, kind: output, shape index: {}]
  %s4 = sld [smem:[#allocation0]]
  $region53: #{tpu_custom_call.1} parent=0
    _
  %s6 = ssub.s32 1, %s4
  %s7 = scalar_select 0, %s6, %s4
  $region1: #{tpu_custom_call.1} parent=0
    #allocation2 [shape = 'u8[32768]{0}', space=vmem, size = 0x8000, scoped, tag = 'input window, operand 0']
    #allocation3 [shape = 's32[2]{0}', space=sflag, size = 0x8, scoped, tag = 'scoped memory for tpu_custom_call.1']
    #allocation4 [shape = 's32[2]{0}', space=sflag, size = 0x8, scoped, tag = 'scoped memory for tpu_custom_call.1']
    #allocation5 [shape = 'u8[196608]{0}', space=vmem, size = 0x30000, scoped, tag = 'input window, operand 1, single buffered']
    #allocation6 [shape = 's32[1]{0}', space=sflag, size = 0x4, scoped, tag = 'scoped memory for tpu_custom_call.1']
    #allocation7 [shape = 'u8[32768]{0}', space=vmem, size = 0x8000, scoped, tag = 'output window, operand 0']
    %8 = vsyncpa [#allocation3], 0
    %s9 = scalar_lea.sflag [#allocation3], 1
    %10 = vsyncpa %s9, 0
    %11 = vsyncpa [#allocation6], 0
    %12 = vsyncpa [#allocation4], 0
    %s13 = scalar_lea.sflag [#allocation4], 1
    %14 = vsyncpa %s13, 0
    loop: start=0, step=1, limit=4
    $region2: #{tpu_custom_call.1} parent=1 // loop_pre_header
      _
    $region3: #{tpu_custom_call.1} parent=1 // loop_header
      %s16 = sphi 0, %s20
      %p17 = scmp.ge.s32.totalorder %s16, 4
      %s26 = sphi 0, %s28
      %s29 = sphi 0, %s26
      %s30 = sphi 0, %s29
      %s46 = sphi 0, %s30
      %s50 = sphi 0, %s50
      %s52 = sphi 0, %s50
      %s53 = sphi 0, %s52
      %s67 = sphi 0, %s53
      %s71 = sphi 0, %s71
      %s73 = sphi 0, %s71
      %s74 = sphi 0, %s73
      %s88 = sphi 0, %s74
      %s94 = sphi 0, %s96
      %s97 = sphi 0, %s94
      %s98 = sphi 0, %s97
      %s114 = sphi 0, %s98
    $region4: #{tpu_custom_call.1} parent=1 // loop_header_branch
      %19 = sbr.rel (%p17) target = $region8
    $region5: #{tpu_custom_call.1} parent=1 // loop_body
      %s21 = ssub.s32 %s16, 1
      %s22 = ssub.s32 %s16, 2
      %s23 = sadd.s32 %s16, 1
      %s24 = ssub.s32 %s16, %s23
      %p25 = scmp.eq.s32.totalorder %s24, 0
      %s27 = sadd.s32 %s26, 1
      %s28 = scalar_select %p25, %s26, %s27
      %p31 = pneg %p25
      %p32 = scmp.eq.s32.totalorder %s16, 1
      %p33 = por %p31, %p32
      %p34 = scmp.ne.s32.totalorder %s26, %s29
      %p35 = scmp.eq.s32.totalorder %s16, 0
      %p36 = por %p34, %p35
      %p37 = scmp.ne.s32.totalorder %s26, %s29
      %p38 = scmp.eq.s32.totalorder %s21, 1
      %p39 = por %p37, %p38
      %p40 = scmp.ne.s32.totalorder %s29, %s30
      %p41 = scmp.eq.s32.totalorder %s21, 0
      %p42 = por %p40, %p41
      %p43 = scmp.ne.s32.totalorder %s29, %s30
      %p44 = scmp.eq.s32.totalorder %s22, 1
      %p45 = por %p43, %p44
      %p47 = scmp.ne.s32.totalorder %s30, %s46
      %p48 = scmp.eq.s32.totalorder %s22, 0
      %p49 = por %p47, %p48
      %s51 = sadd.s32 %s50, 1
      %p54 = scmp.eq.s32.totalorder %s16, 1
      %p55 = scmp.ne.s32.totalorder %s50, %s52
      %p56 = scmp.eq.s32.totalorder %s16, 0
      %p57 = por %p55, %p56
      %p58 = scmp.ne.s32.totalorder %s50, %s52
      %p59 = scmp.eq.s32.totalorder %s21, 1
      %p60 = por %p58, %p59
      %p61 = scmp.ne.s32.totalorder %s52, %s53
      %p62 = scmp.eq.s32.totalorder %s21, 0
      %p63 = por %p61, %p62
      %p64 = scmp.ne.s32.totalorder %s52, %s53
      %p65 = scmp.eq.s32.totalorder %s22, 1
      %p66 = por %p64, %p65
      %p68 = scmp.ne.s32.totalorder %s53, %s67
      %p69 = scmp.eq.s32.totalorder %s22, 0
      %p70 = por %p68, %p69
      %s72 = sadd.s32 %s71, 1
      %p75 = scmp.eq.s32.totalorder %s16, 1
      %p76 = scmp.ne.s32.totalorder %s71, %s73
      %p77 = scmp.eq.s32.totalorder %s16, 0
      %p78 = por %p76, %p77
      %p79 = scmp.ne.s32.totalorder %s71, %s73
      %p80 = scmp.eq.s32.totalorder %s21, 1
      %p81 = por %p79, %p80
      %p82 = scmp.ne.s32.totalorder %s73, %s74
      %p83 = scmp.eq.s32.totalorder %s21, 0
      %p84 = por %p82, %p83
      %p85 = scmp.ne.s32.totalorder %s73, %s74
      %p86 = scmp.eq.s32.totalorder %s22, 1
      %p87 = por %p85, %p86
      %p89 = scmp.ne.s32.totalorder %s74, %s88
      %p90 = scmp.eq.s32.totalorder %s22, 0
      %p91 = por %p89, %p90
      %s92 = ssub.s32 %s16, %s23
      %p93 = scmp.eq.s32.totalorder %s92, 0
      %s95 = sadd.s32 %s94, 1
      %s96 = scalar_select %p93, %s94, %s95
      %p99 = pneg %p93
      %p100 = scmp.eq.s32.totalorder %s16, 1
      %p101 = por %p99, %p100
      %p102 = scmp.ne.s32.totalorder %s94, %s97
      %p103 = scmp.eq.s32.totalorder %s16, 0
      %p104 = por %p102, %p103
      %p105 = scmp.ne.s32.totalorder %s94, %s97
      %p106 = scmp.eq.s32.totalorder %s21, 1
      %p107 = por %p105, %p106
      %p108 = scmp.ne.s32.totalorder %s97, %s98
      %p109 = scmp.eq.s32.totalorder %s21, 0
      %p110 = por %p108, %p109
      %p111 = scmp.ne.s32.totalorder %s97, %s98
      %p112 = scmp.eq.s32.totalorder %s22, 1
      %p113 = por %p111, %p112
      %p115 = scmp.ne.s32.totalorder %s98, %s114
      %p116 = scmp.eq.s32.totalorder %s22, 0
      %p117 = por %p115, %p116
      %p118 = scmp.le.s32.totalorder 1, %s16
      %p119 = scmp.lt.s32.totalorder %s16, 3
      %p120 = pnand %p118, %p119
      %p121 = pneg %p120
      // Predicated region
      $region9: #{tpu_custom_call.1} parent=5 // pred_check
        _
      $region10: #{tpu_custom_call.1} parent=5 // pred_check_branch
        %123 = sbr.rel (%p120) target = $region12
      $region11: #{tpu_custom_call.1} parent=5 // pred_region
        %s124 = ssub.s32 %s16, 1
        // Predicated region
        $region13: #{tpu_custom_call.1} parent=11 // pred_check
          %p125 = pneg %p63
        $region14: #{tpu_custom_call.1} parent=11 // pred_check_branch
          %127 = sbr.rel (%p125) target = $region16
        $region15: #{tpu_custom_call.1} parent=11 // pred_region
          %s129 = ssub.s32 6144, 6144
          %130 = vsyncadd [#allocation6], %s129
          %s131 = sshll.u32 [#allocation5], 4
          %s132 = int_to_ptr.vmem [resolvable:$true] %s131
          %137 = dma.hbm_to_vmem [thread:$0]  %s1, 6144, %s132, [#allocation6], 128, 128, 8
        $region16: #{tpu_custom_call.1} parent=11 // pred_fallthru
          _
        // Predicated region
        $region17: #{tpu_custom_call.1} parent=11 // pred_check
          %p138 = pneg %p84
        $region18: #{tpu_custom_call.1} parent=11 // pred_check_branch
          %140 = sbr.rel (%p138) target = $region20
        $region19: #{tpu_custom_call.1} parent=11 // pred_region
          _
        $region20: #{tpu_custom_call.1} parent=11 // pred_fallthru
          _
      $region12: #{tpu_custom_call.1} parent=5 // pred_fallthru
        _
      %p141 = scmp.lt.s32.totalorder %s16, 2
      // Predicated region
      $region21: #{tpu_custom_call.1} parent=5 // pred_check
        %p142 = pneg %p141
      $region22: #{tpu_custom_call.1} parent=5 // pred_check_branch
        %144 = sbr.rel (%p142) target = $region24
      $region23: #{tpu_custom_call.1} parent=5 // pred_region
        // Predicated region
        $region25: #{tpu_custom_call.1} parent=23 // pred_check
          %p145 = pneg %p36
        $region26: #{tpu_custom_call.1} parent=23 // pred_check_branch
          %147 = sbr.rel (%p145) target = $region28
        $region27: #{tpu_custom_call.1} parent=23 // pred_region
          %s148 = sand.u32 %s26, 1
          %s149 = scalar_lea.sflag [#allocation3], %s148
          %s150 = sand.u32 %s26, 1
          %s151 = smul.addr %s150, 32
          %s152 = scalar_lea.vmem [#allocation2], %s151
          %s153 = smul.u32 4, %s16
          %s155 = ssub.s32 512, 512
          %156 = vsyncadd %s149, %s155
          %s157 = smul.addr %s153, 128
          %s158 = scalar_lea.hbm %s0, %s157
          %s159 = sshll.u32 %s152, 4
          %s160 = int_to_ptr.vmem [resolvable:$true] %s159
          %165 = dma.hbm_to_vmem [thread:$0]  %s158, 512, %s160, %s149, 128, 128, 8
        $region28: #{tpu_custom_call.1} parent=23 // pred_fallthru
          _
      $region24: #{tpu_custom_call.1} parent=5 // pred_fallthru
        _
      %p166 = scmp.le.s32.totalorder 1, %s16
      %p167 = scmp.lt.s32.totalorder %s16, 3
      %p168 = pnand %p166, %p167
      %p169 = pneg %p168
      // Predicated region
      $region29: #{tpu_custom_call.1} parent=5 // pred_check
        _
      $region30: #{tpu_custom_call.1} parent=5 // pred_check_branch
        %171 = sbr.rel (%p168) target = $region32
      $region31: #{tpu_custom_call.1} parent=5 // pred_region
        %s172 = ssub.s32 %s16, 1
        %s173 = sand.u32 %s29, 1
        %s174 = scalar_lea.sflag [#allocation3], %s173
        %s175 = sand.u32 %s29, 1
        %s176 = smul.addr %s175, 32
        %s177 = scalar_lea.vmem [#allocation2], %s176
        // Predicated region
        $region33: #{tpu_custom_call.1} parent=31 // pred_check
          %p178 = pneg %p42
        $region34: #{tpu_custom_call.1} parent=31 // pred_check_branch
          %180 = sbr.rel (%p178) target = $region36
        $region35: #{tpu_custom_call.1} parent=31 // pred_region
          %181 = dma.done %s174, 512
        $region36: #{tpu_custom_call.1} parent=31 // pred_fallthru
          _
        // Predicated region
        $region37: #{tpu_custom_call.1} parent=31 // pred_check
          %p182 = pneg %p63
        $region38: #{tpu_custom_call.1} parent=31 // pred_check_branch
          %184 = sbr.rel (%p182) target = $region40
        $region39: #{tpu_custom_call.1} parent=31 // pred_region
          %185 = dma.done [#allocation6], 6144
        $region40: #{tpu_custom_call.1} parent=31 // pred_fallthru
          _
        %s186 = sand.u32 %s29, 1
        %s187 = scalar_lea.sflag [#allocation3], %s186
        %s188 = sand.u32 %s29, 1
        %s189 = smul.addr %s188, 32
        %s190 = scalar_lea.vmem [#allocation2], %s189
        %p191 = pneg %p42
        %p192 = pneg %p39
        %p193 = pneg %p63
        %p194 = pneg %p60
        %p195 = pneg %p84
        %p196 = pneg %p81
        %p197 = pneg %p110
        %p198 = pneg %p107
        %s199 = sand.u32 %s97, 1
        %s200 = scalar_lea.sflag [#allocation4], %s199
        %s201 = sand.u32 %s97, 1
        %s202 = smul.addr %s201, 32
        %s203 = scalar_lea.vmem [#allocation7], %s202
        %s204 = smul.u32 4, %s21
        %s205 = smul.u32 4, %s21
        %v207 = vld [vmem:[%s177] sm:$0xff]
        %v208 = vld [vmem:[%s177 + $0x8] sm:$0xff]
        %v209 = vld [vmem:[%s177 + $0x10] sm:$0xff]
        %v210 = vld [vmem:[%s177 + $0x18] sm:$0xff]
        %v211 = vpack.c.bf16 %v208, %v207
        %v212 = vpack.c.bf16 %v210, %v209
        %v213 = vld [vmem:[#allocation5] sm:$0xff]
        %v214 = vld [vmem:[#allocation5 + $0x8] sm:$0xff]
        %v215 = vld [vmem:[#allocation5 + $0x10] sm:$0xff]
        %v216 = vld [vmem:[#allocation5 + $0x18] sm:$0xff]
        %v217 = vld [vmem:[#allocation5 + $0x20] sm:$0xff]
        %v218 = vld [vmem:[#allocation5 + $0x28] sm:$0xff]
        %v219 = vld [vmem:[#allocation5 + $0x30] sm:$0xff]
        %v220 = vld [vmem:[#allocation5 + $0x38] sm:$0xff]
        %v221 = vld [vmem:[#allocation5 + $0x40] sm:$0xff]
        %v222 = vld [vmem:[#allocation5 + $0x48] sm:$0xff]
        %v223 = vld [vmem:[#allocation5 + $0x50] sm:$0xff]
        %v224 = vld [vmem:[#allocation5 + $0x58] sm:$0xff]
        %v225 = vld [vmem:[#allocation5 + $0x60] sm:$0xff]
        %v226 = vld [vmem:[#allocation5 + $0x68] sm:$0xff]
        %v227 = vld [vmem:[#allocation5 + $0x70] sm:$0xff]
        %v228 = vld [vmem:[#allocation5 + $0x78] sm:$0xff]
        %v229 = vld [vmem:[%s2] sm:$0x3]
        %v231 = vlaneseq
        %v232 = vshrl.u32 %v231, 7
        %v233 = vsub.s32 0, %v232
        %v234 = vrot.slane %v229, %v233
        %v235 = vlaneseq
        %v236 = vshrl.u32 %v235, 7
        %v237 = vsub.s32 1, %v236
        %v238 = vrot.slane %v229, %v237
        %v257 = vunpack.c.l.b16 %v213
        %v258 = vunpack.c.h.b16 %v213
        %v259 = vunpack.c.l.b16 %v214
        %v260 = vunpack.c.h.b16 %v214
        %v261 = vunpack.c.l.b16 %v215
        %v262 = vunpack.c.h.b16 %v215
        %v263 = vunpack.c.l.b16 %v216
        %v264 = vunpack.c.h.b16 %v216
        %v265 = vunpack.c.l.b16 %v217
        %v266 = vunpack.c.h.b16 %v217
        %v267 = vunpack.c.l.b16 %v218
        %v268 = vunpack.c.h.b16 %v218
        %v269 = vunpack.c.l.b16 %v219
        %v270 = vunpack.c.h.b16 %v219
        %v271 = vunpack.c.l.b16 %v220
        %v272 = vunpack.c.h.b16 %v220
        %v273 = vunpack.c.l.b16 %v221
        %v274 = vunpack.c.h.b16 %v221
        %v275 = vunpack.c.l.b16 %v222
        %v276 = vunpack.c.h.b16 %v222
        %v277 = vunpack.c.l.b16 %v223
        %v278 = vunpack.c.h.b16 %v223
        %v279 = vunpack.c.l.b16 %v224
        %v280 = vunpack.c.h.b16 %v224
        %v281 = vunpack.c.l.b16 %v225
        %v282 = vunpack.c.h.b16 %v225
        %v283 = vunpack.c.l.b16 %v226
        %v284 = vunpack.c.h.b16 %v226
        %v285 = vunpack.c.l.b16 %v227
        %v286 = vunpack.c.h.b16 %v227
        %v287 = vunpack.c.l.b16 %v228
        %v288 = vunpack.c.h.b16 %v228
        %v289 = vpack.c.b16 %v259, %v257
        %v290 = vpack.c.b16 %v260, %v258
        %v291 = vpack.c.b16 %v263, %v261
        %v292 = vpack.c.b16 %v264, %v262
        %v293 = vpack.c.b16 %v267, %v265
        %v294 = vpack.c.b16 %v268, %v266
        %v295 = vpack.c.b16 %v271, %v269
        %v296 = vpack.c.b16 %v272, %v270
        %v297 = vpack.c.b16 %v275, %v273
        %v298 = vpack.c.b16 %v276, %v274
        %v299 = vpack.c.b16 %v279, %v277
        %v300 = vpack.c.b16 %v280, %v278
        %v301 = vpack.c.b16 %v283, %v281
        %v302 = vpack.c.b16 %v284, %v282
        %v303 = vpack.c.b16 %v287, %v285
        %v304 = vpack.c.b16 %v288, %v286
        %321 = vmatprep.subr.bf16.mxu0 %v290
        %322 = vmatpush1.bf16.msra.mxu0 %v289
        %323 = vmatprep.subr.bf16.mxu0 %v292
        %324 = vmatpush1.bf16.msra.mxu0 %v291
        %325 = vmatprep.subr.bf16.mxu0 %v294
        %326 = vmatpush1.bf16.msra.mxu0 %v293
        %327 = vmatprep.subr.bf16.mxu0 %v296
        %328 = vmatpush1.bf16.msra.mxu0 %v295
        %329 = vmatprep.subr.bf16.mxu0 %v298
        %330 = vmatpush1.bf16.msra.mxu0 %v297
        %331 = vmatprep.subr.bf16.mxu0 %v300
        %332 = vmatpush1.bf16.msra.mxu0 %v299
        %333 = vmatprep.subr.bf16.mxu0 %v302
        %334 = vmatpush1.bf16.msra.mxu0 %v301
        %335 = vmatprep.subr.bf16.mxu0 %v304
        %336 = vmatpush1.bf16.msra.mxu0 %v303
        %337 = vmatprep.subr.bf16.mxu0 0
        %338 = vmatpush1.bf16.msra.mxu0 0
        %339 = vmatprep.subr.bf16.mxu0 0
        %340 = vmatpush1.bf16.msra.mxu0 0
        %341 = vmatprep.subr.bf16.mxu0 0
        %342 = vmatpush1.bf16.msra.mxu0 0
        %343 = vmatprep.subr.bf16.mxu0 0
        %344 = vmatpush1.bf16.msra.mxu0 0
        %345 = vmatprep.subr.bf16.mxu0 0
        %346 = vmatpush1.bf16.msra.mxu0 0
        %347 = vmatprep.subr.bf16.mxu0 0
        %348 = vmatpush1.bf16.msra.mxu0 0
        %349 = vmatprep.subr.bf16.mxu0 0
        %350 = vmatpush1.bf16.msra.mxu0 0
        %351 = vmatprep.subr.bf16.mxu0 0
        %352 = vmatpush1.bf16.msra.mxu0 0
        %353 = vmatprep.mubr.bf16.mxu0 0
        %354 = vmatmul.mubr.bf16.gmra.mrb[0].mxu0 %v211
        %v355 = vpop.f32.mrb[0].mxu0
        %v356 = vadd.f32 %v234, %v355
        %v357 = vpop.f32.mrb[0].mxu0
        %v358 = vadd.f32 %v238, %v357
        %v359 = vpop.f32.mrb[0].mxu0
        %v360 = vadd.f32 %v234, %v359
        %v361 = vpop.f32.mrb[0].mxu0
        %v362 = vadd.f32 %v238, %v361
        %363 = vmatprep.mubr.bf16.mxu0 0
        %364 = vmatmul.mubr.bf16.gmra.mrb[0].mxu0 %v212
        %v365 = vpop.f32.mrb[0].mxu0
        %v366 = vadd.f32 %v234, %v365
        %v367 = vpop.f32.mrb[0].mxu0
        %v368 = vadd.f32 %v238, %v367
        %v369 = vpop.f32.mrb[0].mxu0
        %v370 = vadd.f32 %v234, %v369
        %v371 = vpop.f32.mrb[0].mxu0
        %v372 = vadd.f32 %v238, %v371
        %373 = vdwg.mxu0
        %v374 = vmax.f32 %v356, 0.0
        %v375 = vmax.f32 %v360, 0.0
        %v376 = vmax.f32 %v366, 0.0
        %v377 = vmax.f32 %v370, 0.0
        %v378 = vmul.f32 %v358, 0.5
        %v379 = vmul.f32 %v362, 0.5
        %v380 = vmul.f32 %v368, 0.5
        %v381 = vmul.f32 %v372, 0.5
        %v382 = vtanh.pop %v378
        %v383 = vtanh.pop %v379
        %v384 = vtanh.pop %v380
        %v385 = vtanh.pop %v381
        %v386 = vmul.f32 %v382, 0.5
        %v387 = vmul.f32 %v383, 0.5
        %v388 = vmul.f32 %v384, 0.5
        %v389 = vmul.f32 %v385, 0.5
        %v390 = vadd.f32 %v386, 0.5
        %v391 = vadd.f32 %v387, 0.5
        %v392 = vadd.f32 %v388, 0.5
        %v393 = vadd.f32 %v389, 0.5
        %v394 = vsub.f32 %v374, %v207
        %v395 = vsub.f32 %v375, %v208
        %v396 = vsub.f32 %v376, %v209
        %v397 = vsub.f32 %v377, %v210
        %v398 = vmul.f32 %v390, %v394
        %v399 = vmul.f32 %v391, %v395
        %v400 = vmul.f32 %v392, %v396
        %v401 = vmul.f32 %v393, %v397
        %v402 = vadd.f32 %v207, %v398
        %v403 = vadd.f32 %v208, %v399
        %v404 = vadd.f32 %v209, %v400
        %v405 = vadd.f32 %v210, %v401
        %v406 = vpack.c.bf16 %v403, %v402
        %v407 = vpack.c.bf16 %v405, %v404
        %s408 = scalar_lea.vmem [#allocation5], 128
        %v409 = vld [vmem:[%s408] sm:$0xff]
        %v410 = vld [vmem:[%s408 + $0x8] sm:$0xff]
        %v411 = vld [vmem:[%s408 + $0x10] sm:$0xff]
        %v412 = vld [vmem:[%s408 + $0x18] sm:$0xff]
        %v413 = vld [vmem:[%s408 + $0x20] sm:$0xff]
        %v414 = vld [vmem:[%s408 + $0x28] sm:$0xff]
        %v415 = vld [vmem:[%s408 + $0x30] sm:$0xff]
        %v416 = vld [vmem:[%s408 + $0x38] sm:$0xff]
        %v417 = vld [vmem:[%s408 + $0x40] sm:$0xff]
        %v418 = vld [vmem:[%s408 + $0x48] sm:$0xff]
        %v419 = vld [vmem:[%s408 + $0x50] sm:$0xff]
        %v420 = vld [vmem:[%s408 + $0x58] sm:$0xff]
        %v421 = vld [vmem:[%s408 + $0x60] sm:$0xff]
        %v422 = vld [vmem:[%s408 + $0x68] sm:$0xff]
        %v423 = vld [vmem:[%s408 + $0x70] sm:$0xff]
        %v424 = vld [vmem:[%s408 + $0x78] sm:$0xff]
        %s425 = scalar_lea.vmem %s2, 2
        %v426 = vld [vmem:[%s425] sm:$0x3]
        %v428 = vlaneseq
        %v429 = vshrl.u32 %v428, 7
        %v430 = vsub.s32 0, %v429
        %v431 = vrot.slane %v426, %v430
        %v432 = vlaneseq
        %v433 = vshrl.u32 %v432, 7
        %v434 = vsub.s32 1, %v433
        %v435 = vrot.slane %v426, %v434
        %v454 = vunpack.c.l.b16 %v409
        %v455 = vunpack.c.h.b16 %v409
        %v456 = vunpack.c.l.b16 %v410
        %v457 = vunpack.c.h.b16 %v410
        %v458 = vunpack.c.l.b16 %v411
        %v459 = vunpack.c.h.b16 %v411
        %v460 = vunpack.c.l.b16 %v412
        %v461 = vunpack.c.h.b16 %v412
        %v462 = vunpack.c.l.b16 %v413
        %v463 = vunpack.c.h.b16 %v413
        %v464 = vunpack.c.l.b16 %v414
        %v465 = vunpack.c.h.b16 %v414
        %v466 = vunpack.c.l.b16 %v415
        %v467 = vunpack.c.h.b16 %v415
        %v468 = vunpack.c.l.b16 %v416
        %v469 = vunpack.c.h.b16 %v416
        %v470 = vunpack.c.l.b16 %v417
        %v471 = vunpack.c.h.b16 %v417
        %v472 = vunpack.c.l.b16 %v418
        %v473 = vunpack.c.h.b16 %v418
        %v474 = vunpack.c.l.b16 %v419
        %v475 = vunpack.c.h.b16 %v419
        %v476 = vunpack.c.l.b16 %v420
        %v477 = vunpack.c.h.b16 %v420
        %v478 = vunpack.c.l.b16 %v421
        %v479 = vunpack.c.h.b16 %v421
        %v480 = vunpack.c.l.b16 %v422
        %v481 = vunpack.c.h.b16 %v422
        %v482 = vunpack.c.l.b16 %v423
        %v483 = vunpack.c.h.b16 %v423
        %v484 = vunpack.c.l.b16 %v424
        %v485 = vunpack.c.h.b16 %v424
        %v486 = vpack.c.b16 %v456, %v454
        %v487 = vpack.c.b16 %v457, %v455
        %v488 = vpack.c.b16 %v460, %v458
        %v489 = vpack.c.b16 %v461, %v459
        %v490 = vpack.c.b16 %v464, %v462
        %v491 = vpack.c.b16 %v465, %v463
        %v492 = vpack.c.b16 %v468, %v466
        %v493 = vpack.c.b16 %v469, %v467
        %v494 = vpack.c.b16 %v472, %v470
        %v495 = vpack.c.b16 %v473, %v471
        %v496 = vpack.c.b16 %v476, %v474
        %v497 = vpack.c.b16 %v477, %v475
        %v498 = vpack.c.b16 %v480, %v478
        %v499 = vpack.c.b16 %v481, %v479
        %v500 = vpack.c.b16 %v484, %v482
        %v501 = vpack.c.b16 %v485, %v483
        %518 = vmatprep.subr.bf16.mxu0 %v487
        %519 = vmatpush1.bf16.msra.mxu0 %v486
        %520 = vmatprep.subr.bf16.mxu0 %v489
        %521 = vmatpush1.bf16.msra.mxu0 %v488
        %522 = vmatprep.subr.bf16.mxu0 %v491
        %523 = vmatpush1.bf16.msra.mxu0 %v490
        %524 = vmatprep.subr.bf16.mxu0 %v493
        %525 = vmatpush1.bf16.msra.mxu0 %v492
        %526 = vmatprep.subr.bf16.mxu0 %v495
        %527 = vmatpush1.bf16.msra.mxu0 %v494
        %528 = vmatprep.subr.bf16.mxu0 %v497
        %529 = vmatpush1.bf16.msra.mxu0 %v496
        %530 = vmatprep.subr.bf16.mxu0 %v499
        %531 = vmatpush1.bf16.msra.mxu0 %v498
        %532 = vmatprep.subr.bf16.mxu0 %v501
        %533 = vmatpush1.bf16.msra.mxu0 %v500
        %534 = vmatprep.subr.bf16.mxu0 0
        %535 = vmatpush1.bf16.msra.mxu0 0
        %536 = vmatprep.subr.bf16.mxu0 0
        %537 = vmatpush1.bf16.msra.mxu0 0
        %538 = vmatprep.subr.bf16.mxu0 0
        %539 = vmatpush1.bf16.msra.mxu0 0
        %540 = vmatprep.subr.bf16.mxu0 0
        %541 = vmatpush1.bf16.msra.mxu0 0
        %542 = vmatprep.subr.bf16.mxu0 0
        %543 = vmatpush1.bf16.msra.mxu0 0
        %544 = vmatprep.subr.bf16.mxu0 0
        %545 = vmatpush1.bf16.msra.mxu0 0
        %546 = vmatprep.subr.bf16.mxu0 0
        %547 = vmatpush1.bf16.msra.mxu0 0
        %548 = vmatprep.subr.bf16.mxu0 0
        %549 = vmatpush1.bf16.msra.mxu0 0
        %550 = vmatprep.mubr.bf16.mxu0 0
        %551 = vmatmul.mubr.bf16.gmra.mrb[0].mxu0 %v406
        %v552 = vpop.f32.mrb[0].mxu0
        %v553 = vadd.f32 %v431, %v552
        %v554 = vpop.f32.mrb[0].mxu0
        %v555 = vadd.f32 %v435, %v554
        %v556 = vpop.f32.mrb[0].mxu0
        %v557 = vadd.f32 %v431, %v556
        %v558 = vpop.f32.mrb[0].mxu0
        %v559 = vadd.f32 %v435, %v558
        %560 = vmatprep.mubr.bf16.mxu0 0
        %561 = vmatmul.mubr.bf16.gmra.mrb[0].mxu0 %v407
        %v562 = vpop.f32.mrb[0].mxu0
        %v563 = vadd.f32 %v431, %v562
        %v564 = vpop.f32.mrb[0].mxu0
        %v565 = vadd.f32 %v435, %v564
        %v566 = vpop.f32.mrb[0].mxu0
        %v567 = vadd.f32 %v431, %v566
        %v568 = vpop.f32.mrb[0].mxu0
        %v569 = vadd.f32 %v435, %v568
        %570 = vdwg.mxu0
        %v571 = vmax.f32 %v553, 0.0
        %v572 = vmax.f32 %v557, 0.0
        %v573 = vmax.f32 %v563, 0.0
        %v574 = vmax.f32 %v567, 0.0
        %v575 = vmul.f32 %v555, 0.5
        %v576 = vmul.f32 %v559, 0.5
        %v577 = vmul.f32 %v565, 0.5
        %v578 = vmul.f32 %v569, 0.5
        %v579 = vtanh.pop %v575
        %v580 = vtanh.pop %v576
        %v581 = vtanh.pop %v577
        %v582 = vtanh.pop %v578
        %v583 = vmul.f32 %v579, 0.5
        %v584 = vmul.f32 %v580, 0.5
        %v585 = vmul.f32 %v581, 0.5
        %v586 = vmul.f32 %v582, 0.5
        %v587 = vadd.f32 %v583, 0.5
        %v588 = vadd.f32 %v584, 0.5
        %v589 = vadd.f32 %v585, 0.5
        %v590 = vadd.f32 %v586, 0.5
        %v591 = vsub.f32 %v571, %v402
        %v592 = vsub.f32 %v572, %v403
        %v593 = vsub.f32 %v573, %v404
        %v594 = vsub.f32 %v574, %v405
        %v595 = vmul.f32 %v587, %v591
        %v596 = vmul.f32 %v588, %v592
        %v597 = vmul.f32 %v589, %v593
        %v598 = vmul.f32 %v590, %v594
        %v599 = vadd.f32 %v402, %v595
        %v600 = vadd.f32 %v403, %v596
        %v601 = vadd.f32 %v404, %v597
        %v602 = vadd.f32 %v405, %v598
        %v603 = vpack.c.bf16 %v600, %v599
        %v604 = vpack.c.bf16 %v602, %v601
        %s605 = scalar_lea.vmem [#allocation5], 256
        %v606 = vld [vmem:[%s605] sm:$0xff]
        %v607 = vld [vmem:[%s605 + $0x8] sm:$0xff]
        %v608 = vld [vmem:[%s605 + $0x10] sm:$0xff]
        %v609 = vld [vmem:[%s605 + $0x18] sm:$0xff]
        %v610 = vld [vmem:[%s605 + $0x20] sm:$0xff]
        %v611 = vld [vmem:[%s605 + $0x28] sm:$0xff]
        %v612 = vld [vmem:[%s605 + $0x30] sm:$0xff]
        %v613 = vld [vmem:[%s605 + $0x38] sm:$0xff]
        %v614 = vld [vmem:[%s605 + $0x40] sm:$0xff]
        %v615 = vld [vmem:[%s605 + $0x48] sm:$0xff]
        %v616 = vld [vmem:[%s605 + $0x50] sm:$0xff]
        %v617 = vld [vmem:[%s605 + $0x58] sm:$0xff]
        %v618 = vld [vmem:[%s605 + $0x60] sm:$0xff]
        %v619 = vld [vmem:[%s605 + $0x68] sm:$0xff]
        %v620 = vld [vmem:[%s605 + $0x70] sm:$0xff]
        %v621 = vld [vmem:[%s605 + $0x78] sm:$0xff]
        %s622 = scalar_lea.vmem %s2, 4
        %v623 = vld [vmem:[%s622] sm:$0x3]
        %v625 = vlaneseq
        %v626 = vshrl.u32 %v625, 7
        %v627 = vsub.s32 0, %v626
        %v628 = vrot.slane %v623, %v627
        %v629 = vlaneseq
        %v630 = vshrl.u32 %v629, 7
        %v631 = vsub.s32 1, %v630
        %v632 = vrot.slane %v623, %v631
        %v651 = vunpack.c.l.b16 %v606
        %v652 = vunpack.c.h.b16 %v606
        %v653 = vunpack.c.l.b16 %v607
        %v654 = vunpack.c.h.b16 %v607
        %v655 = vunpack.c.l.b16 %v608
        %v656 = vunpack.c.h.b16 %v608
        %v657 = vunpack.c.l.b16 %v609
        %v658 = vunpack.c.h.b16 %v609
        %v659 = vunpack.c.l.b16 %v610
        %v660 = vunpack.c.h.b16 %v610
        %v661 = vunpack.c.l.b16 %v611
        %v662 = vunpack.c.h.b16 %v611
        %v663 = vunpack.c.l.b16 %v612
        %v664 = vunpack.c.h.b16 %v612
        %v665 = vunpack.c.l.b16 %v613
        %v666 = vunpack.c.h.b16 %v613
        %v667 = vunpack.c.l.b16 %v614
        %v668 = vunpack.c.h.b16 %v614
        %v669 = vunpack.c.l.b16 %v615
        %v670 = vunpack.c.h.b16 %v615
        %v671 = vunpack.c.l.b16 %v616
        %v672 = vunpack.c.h.b16 %v616
        %v673 = vunpack.c.l.b16 %v617
        %v674 = vunpack.c.h.b16 %v617
        %v675 = vunpack.c.l.b16 %v618
        %v676 = vunpack.c.h.b16 %v618
        %v677 = vunpack.c.l.b16 %v619
        %v678 = vunpack.c.h.b16 %v619
        %v679 = vunpack.c.l.b16 %v620
        %v680 = vunpack.c.h.b16 %v620
        %v681 = vunpack.c.l.b16 %v621
        %v682 = vunpack.c.h.b16 %v621
        %v683 = vpack.c.b16 %v653, %v651
        %v684 = vpack.c.b16 %v654, %v652
        %v685 = vpack.c.b16 %v657, %v655
        %v686 = vpack.c.b16 %v658, %v656
        %v687 = vpack.c.b16 %v661, %v659
        %v688 = vpack.c.b16 %v662, %v660
        %v689 = vpack.c.b16 %v665, %v663
        %v690 = vpack.c.b16 %v666, %v664
        %v691 = vpack.c.b16 %v669, %v667
        %v692 = vpack.c.b16 %v670, %v668
        %v693 = vpack.c.b16 %v673, %v671
        %v694 = vpack.c.b16 %v674, %v672
        %v695 = vpack.c.b16 %v677, %v675
        %v696 = vpack.c.b16 %v678, %v676
        %v697 = vpack.c.b16 %v681, %v679
        %v698 = vpack.c.b16 %v682, %v680
        %715 = vmatprep.subr.bf16.mxu0 %v684
        %716 = vmatpush1.bf16.msra.mxu0 %v683
        %717 = vmatprep.subr.bf16.mxu0 %v686
        %718 = vmatpush1.bf16.msra.mxu0 %v685
        %719 = vmatprep.subr.bf16.mxu0 %v688
        %720 = vmatpush1.bf16.msra.mxu0 %v687
        %721 = vmatprep.subr.bf16.mxu0 %v690
        %722 = vmatpush1.bf16.msra.mxu0 %v689
        %723 = vmatprep.subr.bf16.mxu0 %v692
        %724 = vmatpush1.bf16.msra.mxu0 %v691
        %725 = vmatprep.subr.bf16.mxu0 %v694
        %726 = vmatpush1.bf16.msra.mxu0 %v693
        %727 = vmatprep.subr.bf16.mxu0 %v696
        %728 = vmatpush1.bf16.msra.mxu0 %v695
        %729 = vmatprep.subr.bf16.mxu0 %v698
        %730 = vmatpush1.bf16.msra.mxu0 %v697
        %731 = vmatprep.subr.bf16.mxu0 0
        %732 = vmatpush1.bf16.msra.mxu0 0
        %733 = vmatprep.subr.bf16.mxu0 0
        %734 = vmatpush1.bf16.msra.mxu0 0
        %735 = vmatprep.subr.bf16.mxu0 0
        %736 = vmatpush1.bf16.msra.mxu0 0
        %737 = vmatprep.subr.bf16.mxu0 0
        %738 = vmatpush1.bf16.msra.mxu0 0
        %739 = vmatprep.subr.bf16.mxu0 0
        %740 = vmatpush1.bf16.msra.mxu0 0
        %741 = vmatprep.subr.bf16.mxu0 0
        %742 = vmatpush1.bf16.msra.mxu0 0
        %743 = vmatprep.subr.bf16.mxu0 0
        %744 = vmatpush1.bf16.msra.mxu0 0
        %745 = vmatprep.subr.bf16.mxu0 0
        %746 = vmatpush1.bf16.msra.mxu0 0
        %747 = vmatprep.mubr.bf16.mxu0 0
        %748 = vmatmul.mubr.bf16.gmra.mrb[0].mxu0 %v603
        %v749 = vpop.f32.mrb[0].mxu0
        %v750 = vadd.f32 %v628, %v749
        %v751 = vpop.f32.mrb[0].mxu0
        %v752 = vadd.f32 %v632, %v751
        %v753 = vpop.f32.mrb[0].mxu0
        %v754 = vadd.f32 %v628, %v753
        %v755 = vpop.f32.mrb[0].mxu0
        %v756 = vadd.f32 %v632, %v755
        %757 = vmatprep.mubr.bf16.mxu0 0
        %758 = vmatmul.mubr.bf16.gmra.mrb[0].mxu0 %v604
        %v759 = vpop.f32.mrb[0].mxu0
        %v760 = vadd.f32 %v628, %v759
        %v761 = vpop.f32.mrb[0].mxu0
        %v762 = vadd.f32 %v632, %v761
        %v763 = vpop.f32.mrb[0].mxu0
        %v764 = vadd.f32 %v628, %v763
        %v765 = vpop.f32.mrb[0].mxu0
        %v766 = vadd.f32 %v632, %v765
        %767 = vdwg.mxu0
        %v768 = vmax.f32 %v750, 0.0
        %v769 = vmax.f32 %v754, 0.0
        %v770 = vmax.f32 %v760, 0.0
        %v771 = vmax.f32 %v764, 0.0
        %v772 = vmul.f32 %v752, 0.5
        %v773 = vmul.f32 %v756, 0.5
        %v774 = vmul.f32 %v762, 0.5
        %v775 = vmul.f32 %v766, 0.5
        %v776 = vtanh.pop %v772
        %v777 = vtanh.pop %v773
        %v778 = vtanh.pop %v774
        %v779 = vtanh.pop %v775
        %v780 = vmul.f32 %v776, 0.5
        %v781 = vmul.f32 %v777, 0.5
        %v782 = vmul.f32 %v778, 0.5
        %v783 = vmul.f32 %v779, 0.5
        %v784 = vadd.f32 %v780, 0.5
        %v785 = vadd.f32 %v781, 0.5
        %v786 = vadd.f32 %v782, 0.5
        %v787 = vadd.f32 %v783, 0.5
        %v788 = vsub.f32 %v768, %v599
        %v789 = vsub.f32 %v769, %v600
        %v790 = vsub.f32 %v770, %v601
        %v791 = vsub.f32 %v771, %v602
        %v792 = vmul.f32 %v784, %v788
        %v793 = vmul.f32 %v785, %v789
        %v794 = vmul.f32 %v786, %v790
        %v795 = vmul.f32 %v787, %v791
        %v796 = vadd.f32 %v599, %v792
        %v797 = vadd.f32 %v600, %v793
        %v798 = vadd.f32 %v601, %v794
        %v799 = vadd.f32 %v602, %v795
        %800 = vst [vmem:[%s203] sm:$0xff] %v796
        %801 = vst [vmem:[%s203 + $0x8] sm:$0xff] %v797
        %802 = vst [vmem:[%s203 + $0x10] sm:$0xff] %v798
        %803 = vst [vmem:[%s203 + $0x18] sm:$0xff] %v799
        %s804 = sand.u32 %s97, 1
        %s805 = scalar_lea.sflag [#allocation4], %s804
        %s806 = sand.u32 %s97, 1
        %s807 = smul.addr %s806, 32
        %s808 = scalar_lea.vmem [#allocation7], %s807
        // Predicated region
        $region41: #{tpu_custom_call.1} parent=31 // pred_check
          %p809 = pneg %p107
        $region42: #{tpu_custom_call.1} parent=31 // pred_check_branch
          %811 = sbr.rel (%p809) target = $region44
        $region43: #{tpu_custom_call.1} parent=31 // pred_region
          %s812 = smul.u32 4, %s21
          %s814 = ssub.s32 512, 512
          %815 = vsyncadd %s805, %s814
          %s816 = smul.addr %s812, 128
          %s817 = scalar_lea.hbm %s3, %s816
          %s818 = sshll.u32 %s808, 4
          %s819 = int_to_ptr.vmem [resolvable:$true] %s818
          %824 = dma.vmem_to_hbm [thread:$0]  %s819, 512, %s817, %s805, 128, 128, 8
        $region44: #{tpu_custom_call.1} parent=31 // pred_fallthru
          _
      $region32: #{tpu_custom_call.1} parent=5 // pred_fallthru
        _
      %p825 = scmp.le.s32.totalorder 2, %s16
      // Predicated region
      $region45: #{tpu_custom_call.1} parent=5 // pred_check
        %p826 = pneg %p825
      $region46: #{tpu_custom_call.1} parent=5 // pred_check_branch
        %828 = sbr.rel (%p826) target = $region48
      $region47: #{tpu_custom_call.1} parent=5 // pred_region
        %s829 = ssub.s32 %s16, 2
        // Predicated region
        $region49: #{tpu_custom_call.1} parent=47 // pred_check
          %p830 = pneg %p113
        $region50: #{tpu_custom_call.1} parent=47 // pred_check_branch
          %832 = sbr.rel (%p830) target = $region52
        $region51: #{tpu_custom_call.1} parent=47 // pred_region
          %s833 = sand.u32 %s98, 1
          %s834 = scalar_lea.sflag [#allocation4], %s833
          %s835 = sand.u32 %s98, 1
          %s836 = smul.addr %s835, 32
          %s837 = scalar_lea.vmem [#allocation7], %s836
          %838 = dma.done %s834, 512
        $region52: #{tpu_custom_call.1} parent=47 // pred_fallthru
          _
      $region48: #{tpu_custom_call.1} parent=5 // pred_fallthru
        _
    $region6: #{tpu_custom_call.1} parent=1 // loop_footer
      %s20 = sadd.s32 1, %s16
    $region7: #{tpu_custom_call.1} parent=1 // loop_footer_branch
      %15 = sbr.rel target = $region3
    $region8: #{tpu_custom_call.1} parent=1 // loop_exit
      _
    %839 = vsyncpa [#allocation3], 1
    %s840 = scalar_lea.sflag [#allocation3], 1
    %841 = vsyncpa %s840, 1
    %842 = vsyncpa [#allocation6], 1
    %843 = vsyncpa [#allocation4], 1
    %s844 = scalar_lea.sflag [#allocation4], 1
    %845 = vsyncpa %s844, 1

</llo_original>
